<compile_context>
chip_gen: v7x
topology: tpu7x:2x2x1
jax: 0.10.0
libtpu: 0.0.40
codegen_flags: <defaults>
</compile_context>

<pallas_src>
import functools

import jax
import jax.numpy as jnp
from jax.experimental import pallas as pl
from jax.experimental.pallas import tpu as pltpu


_LANE = 128
_SUBLANE = 8
_MIN_PAD = _LANE * _SUBLANE  # 1024 batch elements = one full (8,128) f32 slab


def _cdiv(a, b):
    return (a + b - 1) // b


def _round_up(a, b):
    return _cdiv(a, b) * b


def _premodel_kernel(w1_ref, b1_ref, w2_ref, b2_ref, x_ref, o_ref):
    # Params in SMEM, PyTorch nn.Linear layout:
    #   w1_ref: [8, 3]  (fc1.weight, out x in)   b1_ref: [8]
    #   w2_ref: [1, 8]  (fc2.weight)             b2_ref: [1]
    # x_ref: [3, TR, 128]  feature-major, batch on a dense (sublane, lane) slab
    # o_ref: [TR, 128]     lane/sublane-dense output slab
    x0 = x_ref[0].astype(jnp.float32)            # [TR, 128]
    x1 = x_ref[1].astype(jnp.float32)
    x2 = x_ref[2].astype(jnp.float32)

    def hidden(j):
        h = (w1_ref[j, 0] * x0
             + w1_ref[j, 1] * x1
             + w1_ref[j, 2] * x2
             + b1_ref[j])
        return jnp.maximum(h, 0.0)               # ReLU

    # Initialize accumulator from the j=0 hidden unit (fold b2 in, no splat).
    acc = w2_ref[0, 0] * hidden(0) + b2_ref[0]
    for j in range(1, 8):                        # static unroll: pure VPU work
        acc = acc + w2_ref[0, j] * hidden(j)

    o_ref[...] = acc.astype(o_ref.dtype)


@functools.partial(jax.jit, static_argnames=("tile_elems", "min_grid"))
def premodel_forward(x, w1, b1, w2, b2, *, tile_elems=65536, min_grid=2):
    """Forward pass of PreModel.

    x:  [B, 3]   input (batch-major, features last, like nn.Linear input)
    w1: [8, 3]   fc1.weight (PyTorch out x in layout)
    b1: [8]      fc1.bias
    w2: [1, 8]   fc2.weight
    b2: [1]      fc2.bias
    returns [B, 1]   (dtype follows x.dtype; f32 accumulation in-kernel)
    """
    B = x.shape[0]

    # Pad the batch only to a multiple of 1024, then size the per-step tile so
    # that (a) each step carries ~tile_elems batch elements, (b) the grid has
    # >= min_grid steps when the batch allows (v7x megacore), (c) total padding
    # waste stays bounded by ~n_steps*1024 elements (not a whole tile).
    b_1024 = _round_up(B, _MIN_PAD)
    n_steps = max(1, _cdiv(b_1024, tile_elems))
    if b_1024 >= min_grid * _MIN_PAD:
        n_steps = max(n_steps, min_grid)
    tb = _round_up(_cdiv(b_1024, n_steps), _MIN_PAD)   # batch elems per grid step
    b_pad = n_steps * tb
    rows = b_pad // _LANE                              # total sublane rows (mult of 8)
    tr = tb // _LANE                                   # rows per step (mult of 8)

    # Single relayout copy: [B,3] -> [3, rows, 128]; transpose+pad+reshape fuse
    # into one HBM pass under jit. Batch index b maps to (row=b//128, lane=b%128),
    # which the output reshape below inverts exactly (row-major both ways).
    x_fm = jnp.pad(x.T, ((0, 0), (0, b_pad - B))).reshape(3, rows, _LANE)

    smem = pl.BlockSpec(memory_space=pltpu.MemorySpace.SMEM)

    out = pl.pallas_call(
        _premodel_kernel,
        out_shape=jax.ShapeDtypeStruct((rows, _LANE), x.dtype),
        grid=(n_steps,),
        in_specs=[
            smem,                                             # w1 (resident scalars)
            smem,                                             # b1
            smem,                                             # w2
            smem,                                             # b2
            pl.BlockSpec((3, tr, _LANE), lambda i: (0, i, 0)),  # x dense slab tile
        ],
        out_specs=pl.BlockSpec((tr, _LANE), lambda i: (i, 0)),
        compiler_params=pltpu.CompilerParams(
            dimension_semantics=("parallel",)),               # megacore batch split
    )(w1, b1, w2, b2, x_fm)

    # Exact inverse of the input mapping, back to PyTorch output shape [B, 1].
    return out.reshape(b_pad, 1)[:B]


def _reference(x, w1, b1, w2, b2):
    return jnp.maximum(x @ w1.T + b1, 0.0) @ w2.T + b2


if __name__ == "__main__":
    key = jax.random.PRNGKey(0)
    kp, kx1, kx2, kx3 = jax.random.split(key, 4)
    k1, k2, k3, k4 = jax.random.split(kp, 4)
    # Deterministic synthetic params in PyTorch nn.Linear layout.
    w1 = jax.random.normal(k1, (8, 3), jnp.float32) * 0.5   # fc1.weight (out, in)
    b1 = jax.random.normal(k2, (8,), jnp.float32) * 0.1     # fc1.bias
    w2 = jax.random.normal(k3, (1, 8), jnp.float32) * 0.5   # fc2.weight
    b2 = jax.random.normal(k4, (1,), jnp.float32) * 0.1     # fc2.bias

    # Small batch: single (8,128) slab, single grid step.
    x_a = jax.random.normal(kx1, (8, 3), jnp.float32)
    out_a = jax.block_until_ready(premodel_forward(x_a, w1, b1, w2, b2))
    assert out_a.shape == (8, 1)
    assert jnp.allclose(out_a, _reference(x_a, w1, b1, w2, b2), atol=1e-5, rtol=1e-5)

    # Non-multiple-of-128 batch: exercises the 1024-aligned padding path.
    x_b = jax.random.normal(kx2, (300, 3), jnp.float32)
    out_b = jax.block_until_ready(premodel_forward(x_b, w1, b1, w2, b2))
    assert out_b.shape == (300, 1)
    assert jnp.allclose(out_b, _reference(x_b, w1, b1, w2, b2), atol=1e-5, rtol=1e-5)

    # Multi-step grid (small tiles): exercises pipelining + parallel batch axis.
    x_c = jax.random.normal(kx3, (2500, 3), jnp.float32)
    out_c = jax.block_until_ready(
        premodel_forward(x_c, w1, b1, w2, b2, tile_elems=1024))
    assert out_c.shape == (2500, 1)
    assert jnp.allclose(out_c, _reference(x_c, w1, b1, w2, b2), atol=1e-5, rtol=1e-5)

    print("KERNEL_OK")
</pallas_src>

<mosaic_0001>
module attributes {stable_mosaic.version = 11 : i64} {
  func.func @_premodel_kernel(%arg0: i32, %arg1: memref<8x3xf32, #tpu.memory_space<smem>>, %arg2: memref<8xf32, #tpu.memory_space<smem>>, %arg3: memref<1x8xf32, #tpu.memory_space<smem>>, %arg4: memref<1xf32, #tpu.memory_space<smem>>, %arg5: memref<3x8x128xf32, #tpu.memory_space<vmem>>, %arg6: memref<8x128xf32, #tpu.memory_space<vmem>>) attributes {dimension_semantics = [#tpu.dimension_semantics<parallel>], iteration_bounds = array<i64: 1>, scalar_prefetch = 0 : i64, scratch_operands = 0 : i64, tpu.core_type = #tpu.core_type<tc>, window_params = [{transform_indices = @transform_0, window_bounds = array<i64: 8, 3>}, {transform_indices = @transform_1, window_bounds = array<i64: 8>}, {transform_indices = @transform_2, window_bounds = array<i64: 1, 8>}, {transform_indices = @transform_3, window_bounds = array<i64: 1>}, {transform_indices = @transform_4, window_bounds = array<i64: 3, 8, 128>}, {transform_indices = @transform_5, window_bounds = array<i64: 8, 128>}]} {
    %c0 = arith.constant 0 : index
    %c0_0 = arith.constant 0 : index
    %c0_1 = arith.constant 0 : index
    %0 = vector.load %arg5[%c0, %c0_0, %c0_1] : memref<3x8x128xf32, #tpu.memory_space<vmem>>, vector<1x8x128xf32>
    %1 = vector.shape_cast %0 : vector<1x8x128xf32> to vector<8x128xf32>
    %c1 = arith.constant 1 : index
    %c0_2 = arith.constant 0 : index
    %c0_3 = arith.constant 0 : index
    %2 = vector.load %arg5[%c1, %c0_2, %c0_3] : memref<3x8x128xf32, #tpu.memory_space<vmem>>, vector<1x8x128xf32>
    %3 = vector.shape_cast %2 : vector<1x8x128xf32> to vector<8x128xf32>
    %c2 = arith.constant 2 : index
    %c0_4 = arith.constant 0 : index
    %c0_5 = arith.constant 0 : index
    %4 = vector.load %arg5[%c2, %c0_4, %c0_5] : memref<3x8x128xf32, #tpu.memory_space<vmem>>, vector<1x8x128xf32>
    %5 = vector.shape_cast %4 : vector<1x8x128xf32> to vector<8x128xf32>
    %c0_6 = arith.constant 0 : index
    %c0_7 = arith.constant 0 : index
    %6 = memref.load %arg3[%c0_6, %c0_7] : memref<1x8xf32, #tpu.memory_space<smem>>
    %c0_8 = arith.constant 0 : index
    %c0_9 = arith.constant 0 : index
    %7 = memref.load %arg1[%c0_8, %c0_9] : memref<8x3xf32, #tpu.memory_space<smem>>
    %8 = vector.broadcast %7 : f32 to vector<8x128xf32>
    %9 = arith.mulf %8, %1 : vector<8x128xf32>
    %c0_10 = arith.constant 0 : index
    %c1_11 = arith.constant 1 : index
    %10 = memref.load %arg1[%c0_10, %c1_11] : memref<8x3xf32, #tpu.memory_space<smem>>
    %11 = vector.broadcast %10 : f32 to vector<8x128xf32>
    %12 = arith.mulf %11, %3 : vector<8x128xf32>
    %13 = arith.addf %9, %12 : vector<8x128xf32>
    %c0_12 = arith.constant 0 : index
    %c2_13 = arith.constant 2 : index
    %14 = memref.load %arg1[%c0_12, %c2_13] : memref<8x3xf32, #tpu.memory_space<smem>>
    %15 = vector.broadcast %14 : f32 to vector<8x128xf32>
    %16 = arith.mulf %15, %5 : vector<8x128xf32>
    %17 = arith.addf %13, %16 : vector<8x128xf32>
    %c0_14 = arith.constant 0 : index
    %18 = memref.load %arg2[%c0_14] : memref<8xf32, #tpu.memory_space<smem>>
    %19 = vector.broadcast %18 : f32 to vector<8x128xf32>
    %20 = arith.addf %17, %19 : vector<8x128xf32>
    %cst = arith.constant 0.000000e+00 : f32
    %21 = vector.broadcast %cst : f32 to vector<8x128xf32>
    %22 = arith.maximumf %20, %21 : vector<8x128xf32>
    %23 = vector.broadcast %6 : f32 to vector<8x128xf32>
    %24 = arith.mulf %23, %22 : vector<8x128xf32>
    %c0_15 = arith.constant 0 : index
    %25 = memref.load %arg4[%c0_15] : memref<1xf32, #tpu.memory_space<smem>>
    %26 = vector.broadcast %25 : f32 to vector<8x128xf32>
    %27 = arith.addf %24, %26 : vector<8x128xf32>
    %c0_16 = arith.constant 0 : index
    %c1_17 = arith.constant 1 : index
    %28 = memref.load %arg3[%c0_16, %c1_17] : memref<1x8xf32, #tpu.memory_space<smem>>
    %c1_18 = arith.constant 1 : index
    %c0_19 = arith.constant 0 : index
    %29 = memref.load %arg1[%c1_18, %c0_19] : memref<8x3xf32, #tpu.memory_space<smem>>
    %30 = vector.broadcast %29 : f32 to vector<8x128xf32>
    %31 = arith.mulf %30, %1 : vector<8x128xf32>
    %c1_20 = arith.constant 1 : index
    %c1_21 = arith.constant 1 : index
    %32 = memref.load %arg1[%c1_20, %c1_21] : memref<8x3xf32, #tpu.memory_space<smem>>
    %33 = vector.broadcast %32 : f32 to vector<8x128xf32>
    %34 = arith.mulf %33, %3 : vector<8x128xf32>
    %35 = arith.addf %31, %34 : vector<8x128xf32>
    %c1_22 = arith.constant 1 : index
    %c2_23 = arith.constant 2 : index
    %36 = memref.load %arg1[%c1_22, %c2_23] : memref<8x3xf32, #tpu.memory_space<smem>>
    %37 = vector.broadcast %36 : f32 to vector<8x128xf32>
    %38 = arith.mulf %37, %5 : vector<8x128xf32>
    %39 = arith.addf %35, %38 : vector<8x128xf32>
    %c1_24 = arith.constant 1 : index
    %40 = memref.load %arg2[%c1_24] : memref<8xf32, #tpu.memory_space<smem>>
    %41 = vector.broadcast %40 : f32 to vector<8x128xf32>
    %42 = arith.addf %39, %41 : vector<8x128xf32>
    %cst_25 = arith.constant 0.000000e+00 : f32
    %43 = vector.broadcast %cst_25 : f32 to vector<8x128xf32>
    %44 = arith.maximumf %42, %43 : vector<8x128xf32>
    %45 = vector.broadcast %28 : f32 to vector<8x128xf32>
    %46 = arith.mulf %45, %44 : vector<8x128xf32>
    %47 = arith.addf %27, %46 : vector<8x128xf32>
    %c0_26 = arith.constant 0 : index
    %c2_27 = arith.constant 2 : index
    %48 = memref.load %arg3[%c0_26, %c2_27] : memref<1x8xf32, #tpu.memory_space<smem>>
    %c2_28 = arith.constant 2 : index
    %c0_29 = arith.constant 0 : index
    %49 = memref.load %arg1[%c2_28, %c0_29] : memref<8x3xf32, #tpu.memory_space<smem>>
    %50 = vector.broadcast %49 : f32 to vector<8x128xf32>
    %51 = arith.mulf %50, %1 : vector<8x128xf32>
    %c2_30 = arith.constant 2 : index
    %c1_31 = arith.constant 1 : index
    %52 = memref.load %arg1[%c2_30, %c1_31] : memref<8x3xf32, #tpu.memory_space<smem>>
    %53 = vector.broadcast %52 : f32 to vector<8x128xf32>
    %54 = arith.mulf %53, %3 : vector<8x128xf32>
    %55 = arith.addf %51, %54 : vector<8x128xf32>
    %c2_32 = arith.constant 2 : index
    %c2_33 = arith.constant 2 : index
    %56 = memref.load %arg1[%c2_32, %c2_33] : memref<8x3xf32, #tpu.memory_space<smem>>
    %57 = vector.broadcast %56 : f32 to vector<8x128xf32>
    %58 = arith.mulf %57, %5 : vector<8x128xf32>
    %59 = arith.addf %55, %58 : vector<8x128xf32>
    %c2_34 = arith.constant 2 : index
    %60 = memref.load %arg2[%c2_34] : memref<8xf32, #tpu.memory_space<smem>>
    %61 = vector.broadcast %60 : f32 to vector<8x128xf32>
    %62 = arith.addf %59, %61 : vector<8x128xf32>
    %cst_35 = arith.constant 0.000000e+00 : f32
    %63 = vector.broadcast %cst_35 : f32 to vector<8x128xf32>
    %64 = arith.maximumf %62, %63 : vector<8x128xf32>
    %65 = vector.broadcast %48 : f32 to vector<8x128xf32>
    %66 = arith.mulf %65, %64 : vector<8x128xf32>
    %67 = arith.addf %47, %66 : vector<8x128xf32>
    %c0_36 = arith.constant 0 : index
    %c3 = arith.constant 3 : index
    %68 = memref.load %arg3[%c0_36, %c3] : memref<1x8xf32, #tpu.memory_space<smem>>
    %c3_37 = arith.constant 3 : index
    %c0_38 = arith.constant 0 : index
    %69 = memref.load %arg1[%c3_37, %c0_38] : memref<8x3xf32, #tpu.memory_space<smem>>
    %70 = vector.broadcast %69 : f32 to vector<8x128xf32>
    %71 = arith.mulf %70, %1 : vector<8x128xf32>
    %c3_39 = arith.constant 3 : index
    %c1_40 = arith.constant 1 : index
    %72 = memref.load %arg1[%c3_39, %c1_40] : memref<8x3xf32, #tpu.memory_space<smem>>
    %73 = vector.broadcast %72 : f32 to vector<8x128xf32>
    %74 = arith.mulf %73, %3 : vector<8x128xf32>
    %75 = arith.addf %71, %74 : vector<8x128xf32>
    %c3_41 = arith.constant 3 : index
    %c2_42 = arith.constant 2 : index
    %76 = memref.load %arg1[%c3_41, %c2_42] : memref<8x3xf32, #tpu.memory_space<smem>>
    %77 = vector.broadcast %76 : f32 to vector<8x128xf32>
    %78 = arith.mulf %77, %5 : vector<8x128xf32>
    %79 = arith.addf %75, %78 : vector<8x128xf32>
    %c3_43 = arith.constant 3 : index
    %80 = memref.load %arg2[%c3_43] : memref<8xf32, #tpu.memory_space<smem>>
    %81 = vector.broadcast %80 : f32 to vector<8x128xf32>
    %82 = arith.addf %79, %81 : vector<8x128xf32>
    %cst_44 = arith.constant 0.000000e+00 : f32
    %83 = vector.broadcast %cst_44 : f32 to vector<8x128xf32>
    %84 = arith.maximumf %82, %83 : vector<8x128xf32>
    %85 = vector.broadcast %68 : f32 to vector<8x128xf32>
    %86 = arith.mulf %85, %84 : vector<8x128xf32>
    %87 = arith.addf %67, %86 : vector<8x128xf32>
    %c0_45 = arith.constant 0 : index
    %c4 = arith.constant 4 : index
    %88 = memref.load %arg3[%c0_45, %c4] : memref<1x8xf32, #tpu.memory_space<smem>>
    %c4_46 = arith.constant 4 : index
    %c0_47 = arith.constant 0 : index
    %89 = memref.load %arg1[%c4_46, %c0_47] : memref<8x3xf32, #tpu.memory_space<smem>>
    %90 = vector.broadcast %89 : f32 to vector<8x128xf32>
    %91 = arith.mulf %90, %1 : vector<8x128xf32>
    %c4_48 = arith.constant 4 : index
    %c1_49 = arith.constant 1 : index
    %92 = memref.load %arg1[%c4_48, %c1_49] : memref<8x3xf32, #tpu.memory_space<smem>>
    %93 = vector.broadcast %92 : f32 to vector<8x128xf32>
    %94 = arith.mulf %93, %3 : vector<8x128xf32>
    %95 = arith.addf %91, %94 : vector<8x128xf32>
    %c4_50 = arith.constant 4 : index
    %c2_51 = arith.constant 2 : index
    %96 = memref.load %arg1[%c4_50, %c2_51] : memref<8x3xf32, #tpu.memory_space<smem>>
    %97 = vector.broadcast %96 : f32 to vector<8x128xf32>
    %98 = arith.mulf %97, %5 : vector<8x128xf32>
    %99 = arith.addf %95, %98 : vector<8x128xf32>
    %c4_52 = arith.constant 4 : index
    %100 = memref.load %arg2[%c4_52] : memref<8xf32, #tpu.memory_space<smem>>
    %101 = vector.broadcast %100 : f32 to vector<8x128xf32>
    %102 = arith.addf %99, %101 : vector<8x128xf32>
    %cst_53 = arith.constant 0.000000e+00 : f32
    %103 = vector.broadcast %cst_53 : f32 to vector<8x128xf32>
    %104 = arith.maximumf %102, %103 : vector<8x128xf32>
    %105 = vector.broadcast %88 : f32 to vector<8x128xf32>
    %106 = arith.mulf %105, %104 : vector<8x128xf32>
    %107 = arith.addf %87, %106 : vector<8x128xf32>
    %c0_54 = arith.constant 0 : index
    %c5 = arith.constant 5 : index
    %108 = memref.load %arg3[%c0_54, %c5] : memref<1x8xf32, #tpu.memory_space<smem>>
    %c5_55 = arith.constant 5 : index
    %c0_56 = arith.constant 0 : index
    %109 = memref.load %arg1[%c5_55, %c0_56] : memref<8x3xf32, #tpu.memory_space<smem>>
    %110 = vector.broadcast %109 : f32 to vector<8x128xf32>
    %111 = arith.mulf %110, %1 : vector<8x128xf32>
    %c5_57 = arith.constant 5 : index
    %c1_58 = arith.constant 1 : index
    %112 = memref.load %arg1[%c5_57, %c1_58] : memref<8x3xf32, #tpu.memory_space<smem>>
    %113 = vector.broadcast %112 : f32 to vector<8x128xf32>
    %114 = arith.mulf %113, %3 : vector<8x128xf32>
    %115 = arith.addf %111, %114 : vector<8x128xf32>
    %c5_59 = arith.constant 5 : index
    %c2_60 = arith.constant 2 : index
    %116 = memref.load %arg1[%c5_59, %c2_60] : memref<8x3xf32, #tpu.memory_space<smem>>
    %117 = vector.broadcast %116 : f32 to vector<8x128xf32>
    %118 = arith.mulf %117, %5 : vector<8x128xf32>
    %119 = arith.addf %115, %118 : vector<8x128xf32>
    %c5_61 = arith.constant 5 : index
    %120 = memref.load %arg2[%c5_61] : memref<8xf32, #tpu.memory_space<smem>>
    %121 = vector.broadcast %120 : f32 to vector<8x128xf32>
    %122 = arith.addf %119, %121 : vector<8x128xf32>
    %cst_62 = arith.constant 0.000000e+00 : f32
    %123 = vector.broadcast %cst_62 : f32 to vector<8x128xf32>
    %124 = arith.maximumf %122, %123 : vector<8x128xf32>
    %125 = vector.broadcast %108 : f32 to vector<8x128xf32>
    %126 = arith.mulf %125, %124 : vector<8x128xf32>
    %127 = arith.addf %107, %126 : vector<8x128xf32>
    %c0_63 = arith.constant 0 : index
    %c6 = arith.constant 6 : index
    %128 = memref.load %arg3[%c0_63, %c6] : memref<1x8xf32, #tpu.memory_space<smem>>
    %c6_64 = arith.constant 6 : index
    %c0_65 = arith.constant 0 : index
    %129 = memref.load %arg1[%c6_64, %c0_65] : memref<8x3xf32, #tpu.memory_space<smem>>
    %130 = vector.broadcast %129 : f32 to vector<8x128xf32>
    %131 = arith.mulf %130, %1 : vector<8x128xf32>
    %c6_66 = arith.constant 6 : index
    %c1_67 = arith.constant 1 : index
    %132 = memref.load %arg1[%c6_66, %c1_67] : memref<8x3xf32, #tpu.memory_space<smem>>
    %133 = vector.broadcast %132 : f32 to vector<8x128xf32>
    %134 = arith.mulf %133, %3 : vector<8x128xf32>
    %135 = arith.addf %131, %134 : vector<8x128xf32>
    %c6_68 = arith.constant 6 : index
    %c2_69 = arith.constant 2 : index
    %136 = memref.load %arg1[%c6_68, %c2_69] : memref<8x3xf32, #tpu.memory_space<smem>>
    %137 = vector.broadcast %136 : f32 to vector<8x128xf32>
    %138 = arith.mulf %137, %5 : vector<8x128xf32>
    %139 = arith.addf %135, %138 : vector<8x128xf32>
    %c6_70 = arith.constant 6 : index
    %140 = memref.load %arg2[%c6_70] : memref<8xf32, #tpu.memory_space<smem>>
    %141 = vector.broadcast %140 : f32 to vector<8x128xf32>
    %142 = arith.addf %139, %141 : vector<8x128xf32>
    %cst_71 = arith.constant 0.000000e+00 : f32
    %143 = vector.broadcast %cst_71 : f32 to vector<8x128xf32>
    %144 = arith.maximumf %142, %143 : vector<8x128xf32>
    %145 = vector.broadcast %128 : f32 to vector<8x128xf32>
    %146 = arith.mulf %145, %144 : vector<8x128xf32>
    %147 = arith.addf %127, %146 : vector<8x128xf32>
    %c0_72 = arith.constant 0 : index
    %c7 = arith.constant 7 : index
    %148 = memref.load %arg3[%c0_72, %c7] : memref<1x8xf32, #tpu.memory_space<smem>>
    %c7_73 = arith.constant 7 : index
    %c0_74 = arith.constant 0 : index
    %149 = memref.load %arg1[%c7_73, %c0_74] : memref<8x3xf32, #tpu.memory_space<smem>>
    %150 = vector.broadcast %149 : f32 to vector<8x128xf32>
    %151 = arith.mulf %150, %1 : vector<8x128xf32>
    %c7_75 = arith.constant 7 : index
    %c1_76 = arith.constant 1 : index
    %152 = memref.load %arg1[%c7_75, %c1_76] : memref<8x3xf32, #tpu.memory_space<smem>>
    %153 = vector.broadcast %152 : f32 to vector<8x128xf32>
    %154 = arith.mulf %153, %3 : vector<8x128xf32>
    %155 = arith.addf %151, %154 : vector<8x128xf32>
    %c7_77 = arith.constant 7 : index
    %c2_78 = arith.constant 2 : index
    %156 = memref.load %arg1[%c7_77, %c2_78] : memref<8x3xf32, #tpu.memory_space<smem>>
    %157 = vector.broadcast %156 : f32 to vector<8x128xf32>
    %158 = arith.mulf %157, %5 : vector<8x128xf32>
    %159 = arith.addf %155, %158 : vector<8x128xf32>
    %c7_79 = arith.constant 7 : index
    %160 = memref.load %arg2[%c7_79] : memref<8xf32, #tpu.memory_space<smem>>
    %161 = vector.broadcast %160 : f32 to vector<8x128xf32>
    %162 = arith.addf %159, %161 : vector<8x128xf32>
    %cst_80 = arith.constant 0.000000e+00 : f32
    %163 = vector.broadcast %cst_80 : f32 to vector<8x128xf32>
    %164 = arith.maximumf %162, %163 : vector<8x128xf32>
    %165 = vector.broadcast %148 : f32 to vector<8x128xf32>
    %166 = arith.mulf %165, %164 : vector<8x128xf32>
    %167 = arith.addf %147, %166 : vector<8x128xf32>
    %c0_81 = arith.constant 0 : index
    %c0_82 = arith.constant 0 : index
    %168 = vector.load %arg6[%c0_81, %c0_82] : memref<8x128xf32, #tpu.memory_space<vmem>>, vector<8x128xf32>
    tpu.vector_store %arg6[%c0_81, %c0_82], %167 {strides = array<i32>} : memref<8x128xf32, #tpu.memory_space<vmem>>, vector<8x128xf32>,
    return
  }
  func.func @transform_0(%arg0: i32) -> (i32, i32) {
    %c0_i32 = arith.constant 0 : i32
    %c0_i32_0 = arith.constant 0 : i32
    %c0_i32_1 = arith.constant 0 : i32
    return %c0_i32, %c0_i32_0 : i32, i32
  }
  func.func @transform_1(%arg0: i32) -> i32 {
    %c0_i32 = arith.constant 0 : i32
    %c0_i32_0 = arith.constant 0 : i32
    return %c0_i32 : i32
  }
  func.func @transform_2(%arg0: i32) -> (i32, i32) {
    %c0_i32 = arith.constant 0 : i32
    %c0_i32_0 = arith.constant 0 : i32
    %c0_i32_1 = arith.constant 0 : i32
    return %c0_i32, %c0_i32_0 : i32, i32
  }
  func.func @transform_3(%arg0: i32) -> i32 {
    %c0_i32 = arith.constant 0 : i32
    %c0_i32_0 = arith.constant 0 : i32
    return %c0_i32 : i32
  }
  func.func @transform_4(%arg0: i32) -> (i32, i32, i32) {
    %c0_i32 = arith.constant 0 : i32
    %c0_i32_0 = arith.constant 0 : i32
    %c0_i32_1 = arith.constant 0 : i32
    return %c0_i32, %arg0, %c0_i32_0 : i32, i32, i32
  }
  func.func @transform_5(%arg0: i32) -> (i32, i32) {
    %c0_i32 = arith.constant 0 : i32
    %c0_i32_0 = arith.constant 0 : i32
    return %arg0, %c0_i32 : i32, i32
  }
}

</mosaic_0001>

<llo_original>
// kernel: premodel_forward.1
$region0: #{premodel_forward.1}
  #allocation0 [shape = 'u32[]', space=smem, size = 0x4, offset = 0x4, fixed_abs, tag = 'smem constant byte address 0x4 - core index']
  #allocation1 [shape = 'u32[144,128]{1,0:T(1,128)}', space=vmem, size = 0x12000, scoped, tag = 'internal scratch']
  #allocation2 [shape = 'f32[1]{0:T(128)S(6)}', space=smem, size = 0x200, scoped, tag = 'scoped memory for premodel_forward.1']
  %s0 = inlined_call_operand.vmem [shape: f32[8,3], index: 0, kind: input, shape index: {}]
  %s1 = inlined_call_operand.vmem [shape: f32[8], index: 1, kind: input, shape index: {}]
  %s2 = inlined_call_operand.vmem [shape: f32[1,8], index: 2, kind: input, shape index: {}]
  %s3 = inlined_call_operand.<no memory space> [shape: f32[1], index: 3, kind: input, shape index: {}]
  %s4 = inlined_call_operand.vmem [shape: f32[3,8,128], index: 4, kind: input, shape index: {}]
  %s5 = inlined_call_operand.vmem [shape: f32[8,128], index: 5, kind: output, shape index: {}]
  %s6 = sld [smem:[#allocation0]]
  $region42: #{premodel_forward.1} parent=0
    _
  %s8 = ssub.s32 1, %s6
  %s9 = scalar_select 0, %s8, %s6
  %10 = sst [smem:[#allocation2]] %s3
  $region1: #{premodel_forward.1} parent=0
    #allocation3 [shape = 'u8[4096]{0}', space=smem, size = 0x1000, scoped, tag = 'input window, operand 0, single buffered']
    #allocation4 [shape = 's32[1]{0}', space=sflag, size = 0x4, scoped, tag = 'scoped memory for premodel_forward.1']
    #allocation5 [shape = 'u8[512]{0}', space=smem, size = 0x200, scoped, tag = 'input window, operand 1, single buffered']
    #allocation6 [shape = 's32[1]{0}', space=sflag, size = 0x4, scoped, tag = 'scoped memory for premodel_forward.1']
    #allocation7 [shape = 'u8[512]{0}', space=smem, size = 0x200, scoped, tag = 'input window, operand 2, single buffered']
    %11 = vsyncpa [#allocation4], 0
    %12 = vsyncpa [#allocation6], 0
    // Predicated region
    $region2: #{premodel_forward.1} parent=1 // pred_check
      _
    $region3: #{premodel_forward.1} parent=1 // pred_check_branch
      %14 = sbr.rel (0) target = $region5
    $region4: #{premodel_forward.1} parent=1 // pred_region
      %s16 = ssub.s32 128, 128
      %17 = vsyncadd [#allocation4], %s16
      %s19 = sshll.u32 %s0, 4
      %s20 = int_to_ptr.vmem [resolvable:$true] %s19
      %22 = dma.vmem_to_smem %s20, 128, [#allocation3], [#allocation4]
    $region5: #{premodel_forward.1} parent=1 // pred_fallthru
      _
    // Predicated region
    $region6: #{premodel_forward.1} parent=1 // pred_check
      _
    $region7: #{premodel_forward.1} parent=1 // pred_check_branch
      %24 = sbr.rel (0) target = $region9
    $region8: #{premodel_forward.1} parent=1 // pred_region
      %s26 = ssub.s32 16, 16
      %27 = vsyncadd [#allocation6], %s26
      %s29 = sshll.u32 %s1, 4
      %s30 = int_to_ptr.vmem [resolvable:$true] %s29
      %32 = dma.vmem_to_smem %s30, 16, [#allocation5], [#allocation6]
    $region9: #{premodel_forward.1} parent=1 // pred_fallthru
      _
    // Predicated region
    $region10: #{premodel_forward.1} parent=1 // pred_check
      _
    $region11: #{premodel_forward.1} parent=1 // pred_check_branch
      %34 = sbr.rel (0) target = $region13
    $region12: #{premodel_forward.1} parent=1 // pred_region
      %s36 = ssub.s32 16, 16
      %37 = vsyncadd [#allocation6], %s36
      %s39 = sshll.u32 %s2, 4
      %s40 = int_to_ptr.vmem [resolvable:$true] %s39
      %42 = dma.vmem_to_smem %s40, 16, [#allocation7], [#allocation6]
    $region13: #{premodel_forward.1} parent=1 // pred_fallthru
      _
    // Predicated region
    $region14: #{premodel_forward.1} parent=1 // pred_check
      _
    $region15: #{premodel_forward.1} parent=1 // pred_check_branch
      %44 = sbr.rel (0) target = $region17
    $region16: #{premodel_forward.1} parent=1 // pred_region
      _
    $region17: #{premodel_forward.1} parent=1 // pred_fallthru
      _
    // Predicated region
    $region18: #{premodel_forward.1} parent=1 // pred_check
      _
    $region19: #{premodel_forward.1} parent=1 // pred_check_branch
      %46 = sbr.rel (0) target = $region21
    $region20: #{premodel_forward.1} parent=1 // pred_region
      _
    $region21: #{premodel_forward.1} parent=1 // pred_fallthru
      _
    // Predicated region
    $region22: #{premodel_forward.1} parent=1 // pred_check
      _
    $region23: #{premodel_forward.1} parent=1 // pred_check_branch
      %48 = sbr.rel (0) target = $region25
    $region24: #{premodel_forward.1} parent=1 // pred_region
      %49 = dma.done [#allocation4], 128
    $region25: #{premodel_forward.1} parent=1 // pred_fallthru
      _
    // Predicated region
    $region26: #{premodel_forward.1} parent=1 // pred_check
      _
    $region27: #{premodel_forward.1} parent=1 // pred_check_branch
      %51 = sbr.rel (0) target = $region29
    $region28: #{premodel_forward.1} parent=1 // pred_region
      %52 = dma.done [#allocation6], 16
    $region29: #{premodel_forward.1} parent=1 // pred_fallthru
      _
    // Predicated region
    $region30: #{premodel_forward.1} parent=1 // pred_check
      _
    $region31: #{premodel_forward.1} parent=1 // pred_check_branch
      %54 = sbr.rel (0) target = $region33
    $region32: #{premodel_forward.1} parent=1 // pred_region
      %55 = dma.done [#allocation6], 16
    $region33: #{premodel_forward.1} parent=1 // pred_fallthru
      _
    %56 = sfence
    %v57 = vld [vmem:[%s4] sm:$0xff]
    %s58 = scalar_lea.vmem %s4, 8
    %v59 = vld [vmem:[%s58] sm:$0xff]
    %s60 = scalar_lea.vmem %s4, 16
    %v61 = vld [vmem:[%s60] sm:$0xff]
    %s62 = sld [smem:[#allocation7]]
    %s63 = sld [smem:[#allocation3]]
    %v64 = vstv %s63
    %v65 = vmul.f32 %v64, %v57
    %s66 = sld [smem:[#allocation3 + $0x1]]
    %v67 = vstv %s66
    %v68 = vmul.f32 %v67, %v59
    %v69 = vadd.f32 %v65, %v68
    %s70 = sld [smem:[#allocation3 + $0x2]]
    %v71 = vstv %s70
    %v72 = vmul.f32 %v71, %v61
    %v73 = vadd.f32 %v69, %v72
    %s74 = sld [smem:[#allocation5]]
    %v75 = vstv %s74
    %v76 = vadd.f32 %v73, %v75
    %v77 = vmax.f32 %v76, 0.0
    %v78 = vstv %s62
    %v79 = vmul.f32 %v78, %v77
    %s80 = sld [smem:[#allocation2]]
    %v81 = vstv %s80
    %v82 = vadd.f32 %v79, %v81
    %s83 = sld [smem:[#allocation7 + $0x1]]
    %s84 = sld [smem:[#allocation3 + $0x80]]
    %v85 = vstv %s84
    %v86 = vmul.f32 %v85, %v57
    %s87 = sld [smem:[#allocation3 + $0x81]]
    %v88 = vstv %s87
    %v89 = vmul.f32 %v88, %v59
    %v90 = vadd.f32 %v86, %v89
    %s91 = sld [smem:[#allocation3 + $0x82]]
    %v92 = vstv %s91
    %v93 = vmul.f32 %v92, %v61
    %v94 = vadd.f32 %v90, %v93
    %s95 = sld [smem:[#allocation5 + $0x1]]
    %v96 = vstv %s95
    %v97 = vadd.f32 %v94, %v96
    %v98 = vmax.f32 %v97, 0.0
    %v99 = vstv %s83
    %v100 = vmul.f32 %v99, %v98
    %v101 = vadd.f32 %v82, %v100
    %s102 = sld [smem:[#allocation7 + $0x2]]
    %s103 = sld [smem:[#allocation3 + $0x100]]
    %v104 = vstv %s103
    %v105 = vmul.f32 %v104, %v57
    %s106 = sld [smem:[#allocation3 + $0x101]]
    %v107 = vstv %s106
    %v108 = vmul.f32 %v107, %v59
    %v109 = vadd.f32 %v105, %v108
    %s110 = sld [smem:[#allocation3 + $0x102]]
    %v111 = vstv %s110
    %v112 = vmul.f32 %v111, %v61
    %v113 = vadd.f32 %v109, %v112
    %s114 = sld [smem:[#allocation5 + $0x2]]
    %v115 = vstv %s114
    %v116 = vadd.f32 %v113, %v115
    %v117 = vmax.f32 %v116, 0.0
    %v118 = vstv %s102
    %v119 = vmul.f32 %v118, %v117
    %v120 = vadd.f32 %v101, %v119
    %s121 = sld [smem:[#allocation7 + $0x3]]
    %s122 = sld [smem:[#allocation3 + $0x180]]
    %v123 = vstv %s122
    %v124 = vmul.f32 %v123, %v57
    %s125 = sld [smem:[#allocation3 + $0x181]]
    %v126 = vstv %s125
    %v127 = vmul.f32 %v126, %v59
    %v128 = vadd.f32 %v124, %v127
    %s129 = sld [smem:[#allocation3 + $0x182]]
    %v130 = vstv %s129
    %v131 = vmul.f32 %v130, %v61
    %v132 = vadd.f32 %v128, %v131
    %s133 = sld [smem:[#allocation5 + $0x3]]
    %v134 = vstv %s133
    %v135 = vadd.f32 %v132, %v134
    %v136 = vmax.f32 %v135, 0.0
    %v137 = vstv %s121
    %v138 = vmul.f32 %v137, %v136
    %v139 = vadd.f32 %v120, %v138
    %s140 = sld [smem:[#allocation7 + $0x4]]
    %s141 = sld [smem:[#allocation3 + $0x200]]
    %v142 = vstv %s141
    %v143 = vmul.f32 %v142, %v57
    %s144 = sld [smem:[#allocation3 + $0x201]]
    %v145 = vstv %s144
    %v146 = vmul.f32 %v145, %v59
    %v147 = vadd.f32 %v143, %v146
    %s148 = sld [smem:[#allocation3 + $0x202]]
    %v149 = vstv %s148
    %v150 = vmul.f32 %v149, %v61
    %v151 = vadd.f32 %v147, %v150
    %s152 = sld [smem:[#allocation5 + $0x4]]
    %v153 = vstv %s152
    %v154 = vadd.f32 %v151, %v153
    %v155 = vmax.f32 %v154, 0.0
    %v156 = vstv %s140
    %v157 = vmul.f32 %v156, %v155
    %v158 = vadd.f32 %v139, %v157
    %s159 = sld [smem:[#allocation7 + $0x5]]
    %s160 = sld [smem:[#allocation3 + $0x280]]
    %v161 = vstv %s160
    %v162 = vmul.f32 %v161, %v57
    %s163 = sld [smem:[#allocation3 + $0x281]]
    %v164 = vstv %s163
    %v165 = vmul.f32 %v164, %v59
    %v166 = vadd.f32 %v162, %v165
    %s167 = sld [smem:[#allocation3 + $0x282]]
    %v168 = vstv %s167
    %v169 = vmul.f32 %v168, %v61
    %v170 = vadd.f32 %v166, %v169
    %s171 = sld [smem:[#allocation5 + $0x5]]
    %v172 = vstv %s171
    %v173 = vadd.f32 %v170, %v172
    %v174 = vmax.f32 %v173, 0.0
    %v175 = vstv %s159
    %v176 = vmul.f32 %v175, %v174
    %v177 = vadd.f32 %v158, %v176
    %s178 = sld [smem:[#allocation7 + $0x6]]
    %s179 = sld [smem:[#allocation3 + $0x300]]
    %v180 = vstv %s179
    %v181 = vmul.f32 %v180, %v57
    %s182 = sld [smem:[#allocation3 + $0x301]]
    %v183 = vstv %s182
    %v184 = vmul.f32 %v183, %v59
    %v185 = vadd.f32 %v181, %v184
    %s186 = sld [smem:[#allocation3 + $0x302]]
    %v187 = vstv %s186
    %v188 = vmul.f32 %v187, %v61
    %v189 = vadd.f32 %v185, %v188
    %s190 = sld [smem:[#allocation5 + $0x6]]
    %v191 = vstv %s190
    %v192 = vadd.f32 %v189, %v191
    %v193 = vmax.f32 %v192, 0.0
    %v194 = vstv %s178
    %v195 = vmul.f32 %v194, %v193
    %v196 = vadd.f32 %v177, %v195
    %s197 = sld [smem:[#allocation7 + $0x7]]
    %s198 = sld [smem:[#allocation3 + $0x380]]
    %v199 = vstv %s198
    %v200 = vmul.f32 %v199, %v57
    %s201 = sld [smem:[#allocation3 + $0x381]]
    %v202 = vstv %s201
    %v203 = vmul.f32 %v202, %v59
    %v204 = vadd.f32 %v200, %v203
    %s205 = sld [smem:[#allocation3 + $0x382]]
    %v206 = vstv %s205
    %v207 = vmul.f32 %v206, %v61
    %v208 = vadd.f32 %v204, %v207
    %s209 = sld [smem:[#allocation5 + $0x7]]
    %v210 = vstv %s209
    %v211 = vadd.f32 %v208, %v210
    %v212 = vmax.f32 %v211, 0.0
    %v213 = vstv %s197
    %v214 = vmul.f32 %v213, %v212
    %v215 = vadd.f32 %v196, %v214
    %216 = vst [vmem:[%s5] sm:$0xff] %v215
    // Predicated region
    $region34: #{premodel_forward.1} parent=1 // pred_check
      _
    $region35: #{premodel_forward.1} parent=1 // pred_check_branch
      %218 = sbr.rel (0) target = $region37
    $region36: #{premodel_forward.1} parent=1 // pred_region
      _
    $region37: #{premodel_forward.1} parent=1 // pred_fallthru
      _
    // Predicated region
    $region38: #{premodel_forward.1} parent=1 // pred_check
      _
    $region39: #{premodel_forward.1} parent=1 // pred_check_branch
      %220 = sbr.rel (0) target = $region41
    $region40: #{premodel_forward.1} parent=1 // pred_region
      _
    $region41: #{premodel_forward.1} parent=1 // pred_fallthru
      _
    %221 = vsyncpa [#allocation4], 1
    %222 = vsyncpa [#allocation6], 1

</llo_original>
